<compile_context>
chip_gen: v5e
topology: v5e:2x2
jax: 0.10.0
libtpu: 0.0.40
codegen_flags: <defaults>
</compile_context>

<pallas_src>
import jax
import jax.numpy as jnp
from jax.experimental import pallas as pl
from jax.experimental.pallas import tpu as pltpu

TIMIT_LABEL_STRIDE = 160          # samples per feature frame (downsample rate)
TIMIT_PHONE_CLASSES = 39          # output classes
FEAT_DIM = 32                     # synthetic upstream feature dimension
CLASSES_PADDED = 128              # lane-dense padded class dimension
NEG_INF = -1e30                   # bias for padded (fake) classes
TILE_MIN = 16                     # minimum row tile (bf16 sublane packing)


def _round_up(x, m):
    return ((x + m - 1) // m) * m


def _posterior_kernel(frames_ref, wc_ref, bc_ref, out_ref):
    """Fused: softmax(frames @ Wc + bc) over 128 lane-dense classes.

    frames_ref : (TILE_M, FRAME)          bf16  VMEM
    wc_ref     : (FRAME, CLASSES_PADDED)  bf16  VMEM
    bc_ref     : (1, CLASSES_PADDED)      f32   VMEM  (padded entries = -1e30)
    out_ref    : (TILE_M, CLASSES_PADDED) bf16  VMEM
    """
    logits = jnp.dot(frames_ref[...], wc_ref[...],
                     preferred_element_type=jnp.float32)          # (TILE_M, 128) f32
    logits = logits + bc_ref[...]                                  # padded cols -> -1e30

    # Row-wise softmax in f32; padded columns get exp(-1e30 - m) == 0 mass.
    m = jnp.max(logits, axis=-1, keepdims=True)
    e = jnp.exp(logits - m)
    denom = jnp.sum(e, axis=-1, keepdims=True)
    out_ref[...] = (e * pl.reciprocal(denom, approx=True)).astype(out_ref.dtype)


def upstream_expert_forward(wavs, w1, b1, w2, b2, *, tile_m=2048):
    """Pallas-backed forward of UpstreamExpert.

    Args:
      wavs: list of 1-D float32 arrays (unpadded 16 kHz waveforms).
      w1:   (FRAME, D)  upstream projection weight.
      b1:   (D,)        upstream projection bias.
      w2:   (D, C)      downstream classifier weight.
      b2:   (C,)        downstream classifier bias.

    Returns:
      list of unpadded posterior arrays, each (T_i, C) float32, rows sum to 1.
    """
    frame = TIMIT_LABEL_STRIDE

    # --- "upstream" framing: T_i = floor(len(wav) / 160) feature frames. ---
    # Cast each segment to bf16 right away (single pass per wav; halves the
    # HBM traffic of the concatenate below and of the kernel's input DMA).
    framed, lengths = [], []
    for w in wavs:
        t = int(w.shape[0]) // frame
        seg = jnp.reshape(w[: t * frame].astype(jnp.float32), (t, frame))
        framed.append(seg.astype(jnp.bfloat16))
        lengths.append(t)
    m_total = sum(lengths)
    assert m_total > 0, "all wavs shorter than one frame"

    # --- Fuse the two linear layers (exact, both are purely linear). ---
    w1f = w1.astype(jnp.float32)
    w2f = w2.astype(jnp.float32)
    wc = w1f @ w2f                                                  # (FRAME, C)
    bc = b1.astype(jnp.float32) @ w2f + b2.astype(jnp.float32)      # (C,)
    c = wc.shape[1]

    # Lane-dense padding of the class dimension to 128 (keep K=160 unpadded).
    wc_pad = jnp.zeros((frame, CLASSES_PADDED), jnp.float32).at[:, :c].set(wc)
    bc_pad = jnp.full((1, CLASSES_PADDED), NEG_INF, jnp.float32).at[0, :c].set(bc)
    wc_bf16 = wc_pad.astype(jnp.bfloat16)

    # --- Row-tile selection ---------------------------------------------
    # Round the padded row count up to a multiple of the tile (waste < 8 rows
    # per tile, vs up to ~2x with power-of-two bucketing), and force >= 2 grid
    # steps when there are enough rows so v7x megacore uses both TensorCores.
    # TODO(synk): bucket m_total coarsely if recompile count matters.
    ntiles = max(1, pl.cdiv(m_total, tile_m))
    if ntiles == 1 and m_total >= 2 * TILE_MIN:
        ntiles = 2
    tile = max(8, _round_up(pl.cdiv(m_total, ntiles), 8))
    m_bucket = tile * ntiles

    # --- Flatten batch*time: all real frames + padding block, one concat. ---
    # (Identical to pad_sequence + slice-[:l]: the head is purely per-frame.)
    parts = list(framed)
    if m_bucket > m_total:
        parts.append(jnp.zeros((m_bucket - m_total, frame), jnp.bfloat16))
    frames_bf16 = jnp.concatenate(parts, axis=0)                    # (m_bucket, FRAME)

    grid = (ntiles,)

    cost = pl.CostEstimate(
        flops=2 * m_bucket * frame * CLASSES_PADDED,
        transcendentals=m_bucket * CLASSES_PADDED,
        bytes_accessed=(frames_bf16.size * 2          # bf16 frames read
                        + wc_bf16.size * 2            # bf16 fused weight read
                        + bc_pad.size * 4             # f32 bias read
                        + m_bucket * CLASSES_PADDED * 2),  # bf16 posteriors write
    )

    posteriors_padded = pl.pallas_call(
        _posterior_kernel,
        out_shape=jax.ShapeDtypeStruct((m_bucket, CLASSES_PADDED), jnp.bfloat16),
        grid=grid,
        in_specs=[
            pl.BlockSpec((tile, frame), lambda i: (i, 0)),
            pl.BlockSpec((frame, CLASSES_PADDED), lambda i: (0, 0)),
            pl.BlockSpec((1, CLASSES_PADDED), lambda i: (0, 0)),
        ],
        out_specs=pl.BlockSpec((tile, CLASSES_PADDED), lambda i: (i, 0)),
        compiler_params=pltpu.CompilerParams(
            dimension_semantics=("parallel",),   # shards row tiles across TCs on v7x
        ),
        cost_estimate=cost,
    )(frames_bf16, wc_bf16, bc_pad)

    # --- Single slice of real rows/classes + upcast, then per-wav split. ---
    posteriors = posteriors_padded[:m_total, :TIMIT_PHONE_CLASSES].astype(jnp.float32)
    outs = []
    off = 0
    for t in lengths:
        outs.append(posteriors[off: off + t])
        off += t
    return outs


def _reference_forward(wavs, w1, b1, w2, b2):
    """Pure-JAX f32 reference matching the PyTorch module semantics."""
    frame = TIMIT_LABEL_STRIDE
    outs = []
    for w in wavs:
        t = int(w.shape[0]) // frame
        frames = jnp.reshape(w[: t * frame].astype(jnp.float32), (t, frame))
        feats = frames @ w1.astype(jnp.float32) + b1.astype(jnp.float32)
        logits = feats @ w2.astype(jnp.float32) + b2.astype(jnp.float32)
        outs.append(jax.nn.softmax(logits, axis=-1))
    return outs


if __name__ == "__main__":
    key = jax.random.PRNGKey(0)
    k_w1, k_b1, k_w2, k_b2, k_wav1, k_wav2, k_wav3 = jax.random.split(key, 7)

    # Deterministic synthetic parameters (checkpoint is not loadable here).
    w1 = 0.02 * jax.random.normal(k_w1, (TIMIT_LABEL_STRIDE, FEAT_DIM), jnp.float32)
    b1 = 0.01 * jax.random.normal(k_b1, (FEAT_DIM,), jnp.float32)
    w2 = 0.05 * jax.random.normal(k_w2, (FEAT_DIM, TIMIT_PHONE_CLASSES), jnp.float32)
    b2 = 0.01 * jax.random.normal(k_b2, (TIMIT_PHONE_CLASSES,), jnp.float32)

    # Three unpadded "wavs" of different lengths (8, 6 and 20 frames worth);
    # total 34 frames -> exercises the multi-tile (grid >= 2) path as well.
    wav1 = jax.random.normal(k_wav1, (8 * TIMIT_LABEL_STRIDE,), jnp.float32)
    wav2 = jax.random.normal(k_wav2, (6 * TIMIT_LABEL_STRIDE,), jnp.float32)
    wav3 = jax.random.normal(k_wav3, (20 * TIMIT_LABEL_STRIDE,), jnp.float32)
    wavs = [wav1, wav2, wav3]

    posteriors = upstream_expert_forward(wavs, w1, b1, w2, b2)
    for p in posteriors:
        jax.block_until_ready(p)

    # Sanity: shapes, softmax normalization, and match vs. f32 reference.
    assert posteriors[0].shape == (8, TIMIT_PHONE_CLASSES)
    assert posteriors[1].shape == (6, TIMIT_PHONE_CLASSES)
    assert posteriors[2].shape == (20, TIMIT_PHONE_CLASSES)
    for p in posteriors:
        # bf16 output + approx reciprocal: rows normalize to ~1e-3 relative.
        row_sums = jnp.sum(p, axis=-1)
        assert bool(jnp.all(jnp.abs(row_sums - 1.0) < 1e-2)), "softmax rows not normalized"

    ref = _reference_forward(wavs, w1, b1, w2, b2)
    for p, r in zip(posteriors, ref):
        err = jnp.max(jnp.abs(p - r))
        assert bool(err < 2e-2), f"posterior mismatch vs reference: {float(err)}"

    print("KERNEL_OK")
</pallas_src>

<mosaic_0001>
module attributes {stable_mosaic.version = 11 : i64} {
  func.func @_posterior_kernel(%arg0: i32, %arg1: memref<24x160xbf16, #tpu.memory_space<vmem>>, %arg2: memref<160x128xbf16, #tpu.memory_space<vmem>>, %arg3: memref<1x128xf32, #tpu.memory_space<vmem>>, %arg4: memref<24x128xbf16, #tpu.memory_space<vmem>>) attributes {dimension_semantics = [#tpu.dimension_semantics<parallel>], iteration_bounds = array<i64: 2>, scalar_prefetch = 0 : i64, scratch_operands = 0 : i64, tpu.core_type = #tpu.core_type<tc>, window_params = [{transform_indices = @transform_0, window_bounds = array<i64: 24, 160>}, {pipeline_mode = #tpu.pipeline_mode<synchronous>, transform_indices = @transform_1, window_bounds = array<i64: 160, 128>}, {pipeline_mode = #tpu.pipeline_mode<synchronous>, transform_indices = @transform_2, window_bounds = array<i64: 1, 128>}, {transform_indices = @transform_3, window_bounds = array<i64: 24, 128>}]} {
    %c0 = arith.constant 0 : index
    %c0_0 = arith.constant 0 : index
    %0 = vector.load %arg1[%c0, %c0_0] : memref<24x160xbf16, #tpu.memory_space<vmem>>, vector<24x160xbf16>
    %c0_1 = arith.constant 0 : index
    %c0_2 = arith.constant 0 : index
    %1 = vector.load %arg2[%c0_1, %c0_2] : memref<160x128xbf16, #tpu.memory_space<vmem>>, vector<160x128xbf16>
    %cst = arith.constant dense<0.000000e+00> : vector<24x128xf32>
    %2 = tpu.matmul %0, %1, %cst {dimension_numbers = #tpu.dot_dimension_numbers<[1], [0], [0], [1], [0, 0, 1, 1], [], []>} : vector<24x160xbf16>, vector<160x128xbf16>, vector<24x128xf32> -> vector<24x128xf32>
    %c0_3 = arith.constant 0 : index
    %c0_4 = arith.constant 0 : index
    %3 = vector.load %arg3[%c0_3, %c0_4] : memref<1x128xf32, #tpu.memory_space<vmem>>, vector<1x128xf32>
    %4 = vector.broadcast %3 : vector<1x128xf32> to vector<24x128xf32>
    %5 = arith.addf %2, %4 : vector<24x128xf32>
    %cst_5 = arith.constant dense<0xFF800000> : vector<24xf32>
    %6 = vector.multi_reduction <maximumf>, %5, %cst_5 [1] : vector<24x128xf32> to vector<24xf32>
    %7 = vector.shape_cast %6 : vector<24xf32> to vector<24x1xf32>
    %8 = vector.broadcast %7 : vector<24x1xf32> to vector<24x128xf32>
    %9 = arith.subf %5, %8 : vector<24x128xf32>
    %10 = math.exp %9 : vector<24x128xf32>
    %cst_6 = arith.constant dense<0.000000e+00> : vector<24xf32>
    %11 = vector.multi_reduction <add>, %10, %cst_6 [1] : vector<24x128xf32> to vector<24xf32>
    %12 = vector.shape_cast %11 : vector<24xf32> to vector<24x1xf32>
    %13 = tpu.reciprocal %12 {approx = true} : vector<24x1xf32> -> vector<24x1xf32>
    %14 = vector.broadcast %13 : vector<24x1xf32> to vector<24x128xf32>
    %15 = arith.mulf %10, %14 : vector<24x128xf32>
    %16 = arith.truncf %15 : vector<24x128xf32> to vector<24x128xbf16>
    %c0_7 = arith.constant 0 : index
    %c0_8 = arith.constant 0 : index
    %17 = vector.load %arg4[%c0_7, %c0_8] : memref<24x128xbf16, #tpu.memory_space<vmem>>, vector<24x128xbf16>
    tpu.vector_store %arg4[%c0_7, %c0_8], %16 {strides = array<i32>} : memref<24x128xbf16, #tpu.memory_space<vmem>>, vector<24x128xbf16>,
    return
  }
  func.func @transform_0(%arg0: i32) -> (i32, i32) {
    %c0_i32 = arith.constant 0 : i32
    %c0_i32_0 = arith.constant 0 : i32
    return %arg0, %c0_i32 : i32, i32
  }
  func.func @transform_1(%arg0: i32) -> (i32, i32) {
    %c0_i32 = arith.constant 0 : i32
    %c0_i32_0 = arith.constant 0 : i32
    %c0_i32_1 = arith.constant 0 : i32
    return %c0_i32, %c0_i32_0 : i32, i32
  }
  func.func @transform_2(%arg0: i32) -> (i32, i32) {
    %c0_i32 = arith.constant 0 : i32
    %c0_i32_0 = arith.constant 0 : i32
    %c0_i32_1 = arith.constant 0 : i32
    return %c0_i32, %c0_i32_0 : i32, i32
  }
  func.func @transform_3(%arg0: i32) -> (i32, i32) {
    %c0_i32 = arith.constant 0 : i32
    %c0_i32_0 = arith.constant 0 : i32
    return %arg0, %c0_i32 : i32, i32
  }
}

</mosaic_0001>

<llo_original>
// kernel: tpu_custom_call.1
$region0: #{tpu_custom_call.1}
  #allocation0 [shape = 'u32[]', space=smem, size = 0x4, offset = 0x4, fixed_abs, tag = 'smem constant byte address 0x4 - core index']
  #allocation1 [shape = 'u32[72,128]{1,0:T(1,128)}', space=vmem, size = 0x9000, scoped, tag = 'internal scratch']
  %s0 = inlined_call_operand.hbm [shape: bf16[48,160], index: 0, kind: input, shape index: {}]
  %s1 = inlined_call_operand.hbm [shape: bf16[160,128], index: 1, kind: input, shape index: {}]
  %s2 = inlined_call_operand.vmem [shape: f32[1,128], index: 2, kind: input, shape index: {}]
  %s3 = inlined_call_operand.hbm [shape: bf16[48,128], index: 3, kind: output, shape index: {}]
  %s4 = sld [smem:[#allocation0]]
  $region53: #{tpu_custom_call.1} parent=0
    _
  %s6 = ssub.s32 1, %s4
  %s7 = scalar_select 0, %s6, %s4
  $region1: #{tpu_custom_call.1} parent=0
    #allocation2 [shape = 'u8[24576]{0}', space=vmem, size = 0x6000, scoped, tag = 'input window, operand 0']
    #allocation3 [shape = 's32[2]{0}', space=sflag, size = 0x8, scoped, tag = 'scoped memory for tpu_custom_call.1']
    #allocation4 [shape = 's32[2]{0}', space=sflag, size = 0x8, scoped, tag = 'scoped memory for tpu_custom_call.1']
    #allocation5 [shape = 'u8[40960]{0}', space=vmem, size = 0xa000, scoped, tag = 'input window, operand 1, single buffered']
    #allocation6 [shape = 's32[1]{0}', space=sflag, size = 0x4, scoped, tag = 'scoped memory for tpu_custom_call.1']
    #allocation7 [shape = 'u8[12288]{0}', space=vmem, size = 0x3000, scoped, tag = 'output window, operand 0']
    %8 = vsyncpa [#allocation3], 0
    %s9 = scalar_lea.sflag [#allocation3], 1
    %10 = vsyncpa %s9, 0
    %11 = vsyncpa [#allocation6], 0
    %12 = vsyncpa [#allocation4], 0
    %s13 = scalar_lea.sflag [#allocation4], 1
    %14 = vsyncpa %s13, 0
    loop: start=0, step=1, limit=4
    $region2: #{tpu_custom_call.1} parent=1 // loop_pre_header
      _
    $region3: #{tpu_custom_call.1} parent=1 // loop_header
      %s16 = sphi 0, %s20
      %p17 = scmp.ge.s32.totalorder %s16, 4
      %s26 = sphi 0, %s28
      %s29 = sphi 0, %s26
      %s30 = sphi 0, %s29
      %s46 = sphi 0, %s30
      %s50 = sphi 0, %s50
      %s52 = sphi 0, %s50
      %s53 = sphi 0, %s52
      %s67 = sphi 0, %s53
      %s71 = sphi 0, %s71
      %s73 = sphi 0, %s71
      %s74 = sphi 0, %s73
      %s88 = sphi 0, %s74
      %s94 = sphi 0, %s96
      %s97 = sphi 0, %s94
      %s98 = sphi 0, %s97
      %s114 = sphi 0, %s98
    $region4: #{tpu_custom_call.1} parent=1 // loop_header_branch
      %19 = sbr.rel (%p17) target = $region8
    $region5: #{tpu_custom_call.1} parent=1 // loop_body
      %s21 = ssub.s32 %s16, 1
      %s22 = ssub.s32 %s16, 2
      %s23 = sadd.s32 %s16, 1
      %s24 = ssub.s32 %s16, %s23
      %p25 = scmp.eq.s32.totalorder %s24, 0
      %s27 = sadd.s32 %s26, 1
      %s28 = scalar_select %p25, %s26, %s27
      %p31 = pneg %p25
      %p32 = scmp.eq.s32.totalorder %s16, 1
      %p33 = por %p31, %p32
      %p34 = scmp.ne.s32.totalorder %s26, %s29
      %p35 = scmp.eq.s32.totalorder %s16, 0
      %p36 = por %p34, %p35
      %p37 = scmp.ne.s32.totalorder %s26, %s29
      %p38 = scmp.eq.s32.totalorder %s21, 1
      %p39 = por %p37, %p38
      %p40 = scmp.ne.s32.totalorder %s29, %s30
      %p41 = scmp.eq.s32.totalorder %s21, 0
      %p42 = por %p40, %p41
      %p43 = scmp.ne.s32.totalorder %s29, %s30
      %p44 = scmp.eq.s32.totalorder %s22, 1
      %p45 = por %p43, %p44
      %p47 = scmp.ne.s32.totalorder %s30, %s46
      %p48 = scmp.eq.s32.totalorder %s22, 0
      %p49 = por %p47, %p48
      %s51 = sadd.s32 %s50, 1
      %p54 = scmp.eq.s32.totalorder %s16, 1
      %p55 = scmp.ne.s32.totalorder %s50, %s52
      %p56 = scmp.eq.s32.totalorder %s16, 0
      %p57 = por %p55, %p56
      %p58 = scmp.ne.s32.totalorder %s50, %s52
      %p59 = scmp.eq.s32.totalorder %s21, 1
      %p60 = por %p58, %p59
      %p61 = scmp.ne.s32.totalorder %s52, %s53
      %p62 = scmp.eq.s32.totalorder %s21, 0
      %p63 = por %p61, %p62
      %p64 = scmp.ne.s32.totalorder %s52, %s53
      %p65 = scmp.eq.s32.totalorder %s22, 1
      %p66 = por %p64, %p65
      %p68 = scmp.ne.s32.totalorder %s53, %s67
      %p69 = scmp.eq.s32.totalorder %s22, 0
      %p70 = por %p68, %p69
      %s72 = sadd.s32 %s71, 1
      %p75 = scmp.eq.s32.totalorder %s16, 1
      %p76 = scmp.ne.s32.totalorder %s71, %s73
      %p77 = scmp.eq.s32.totalorder %s16, 0
      %p78 = por %p76, %p77
      %p79 = scmp.ne.s32.totalorder %s71, %s73
      %p80 = scmp.eq.s32.totalorder %s21, 1
      %p81 = por %p79, %p80
      %p82 = scmp.ne.s32.totalorder %s73, %s74
      %p83 = scmp.eq.s32.totalorder %s21, 0
      %p84 = por %p82, %p83
      %p85 = scmp.ne.s32.totalorder %s73, %s74
      %p86 = scmp.eq.s32.totalorder %s22, 1
      %p87 = por %p85, %p86
      %p89 = scmp.ne.s32.totalorder %s74, %s88
      %p90 = scmp.eq.s32.totalorder %s22, 0
      %p91 = por %p89, %p90
      %s92 = ssub.s32 %s16, %s23
      %p93 = scmp.eq.s32.totalorder %s92, 0
      %s95 = sadd.s32 %s94, 1
      %s96 = scalar_select %p93, %s94, %s95
      %p99 = pneg %p93
      %p100 = scmp.eq.s32.totalorder %s16, 1
      %p101 = por %p99, %p100
      %p102 = scmp.ne.s32.totalorder %s94, %s97
      %p103 = scmp.eq.s32.totalorder %s16, 0
      %p104 = por %p102, %p103
      %p105 = scmp.ne.s32.totalorder %s94, %s97
      %p106 = scmp.eq.s32.totalorder %s21, 1
      %p107 = por %p105, %p106
      %p108 = scmp.ne.s32.totalorder %s97, %s98
      %p109 = scmp.eq.s32.totalorder %s21, 0
      %p110 = por %p108, %p109
      %p111 = scmp.ne.s32.totalorder %s97, %s98
      %p112 = scmp.eq.s32.totalorder %s22, 1
      %p113 = por %p111, %p112
      %p115 = scmp.ne.s32.totalorder %s98, %s114
      %p116 = scmp.eq.s32.totalorder %s22, 0
      %p117 = por %p115, %p116
      %p118 = scmp.le.s32.totalorder 1, %s16
      %p119 = scmp.lt.s32.totalorder %s16, 3
      %p120 = pnand %p118, %p119
      %p121 = pneg %p120
      // Predicated region
      $region9: #{tpu_custom_call.1} parent=5 // pred_check
        _
      $region10: #{tpu_custom_call.1} parent=5 // pred_check_branch
        %123 = sbr.rel (%p120) target = $region12
      $region11: #{tpu_custom_call.1} parent=5 // pred_region
        %s124 = ssub.s32 %s16, 1
        // Predicated region
        $region13: #{tpu_custom_call.1} parent=11 // pred_check
          %p125 = pneg %p63
        $region14: #{tpu_custom_call.1} parent=11 // pred_check_branch
          %127 = sbr.rel (%p125) target = $region16
        $region15: #{tpu_custom_call.1} parent=11 // pred_region
          %129 = vsyncadd [#allocation6], 0
          %s130 = sshll.u32 %s1, 4
          %s131 = int_to_ptr.hbm [resolvable:$true] %s130
          %s132 = sshll.u32 [#allocation5], 4
          %s133 = int_to_ptr.vmem [resolvable:$true] %s132
          %138 = dma.hbm_to_vmem [thread:$0]  %s131, 1280, %s133, [#allocation6], 64, 64, 4
        $region16: #{tpu_custom_call.1} parent=11 // pred_fallthru
          _
        // Predicated region
        $region17: #{tpu_custom_call.1} parent=11 // pred_check
          %p139 = pneg %p84
        $region18: #{tpu_custom_call.1} parent=11 // pred_check_branch
          %141 = sbr.rel (%p139) target = $region20
        $region19: #{tpu_custom_call.1} parent=11 // pred_region
          _
        $region20: #{tpu_custom_call.1} parent=11 // pred_fallthru
          _
      $region12: #{tpu_custom_call.1} parent=5 // pred_fallthru
        _
      %p142 = scmp.lt.s32.totalorder %s16, 2
      // Predicated region
      $region21: #{tpu_custom_call.1} parent=5 // pred_check
        %p143 = pneg %p142
      $region22: #{tpu_custom_call.1} parent=5 // pred_check_branch
        %145 = sbr.rel (%p143) target = $region24
      $region23: #{tpu_custom_call.1} parent=5 // pred_region
        // Predicated region
        $region25: #{tpu_custom_call.1} parent=23 // pred_check
          %p146 = pneg %p36
        $region26: #{tpu_custom_call.1} parent=23 // pred_check_branch
          %148 = sbr.rel (%p146) target = $region28
        $region27: #{tpu_custom_call.1} parent=23 // pred_region
          %s149 = sand.u32 %s26, 1
          %s150 = scalar_lea.sflag [#allocation3], %s149
          %s151 = sand.u32 %s26, 1
          %s152 = smul.addr %s151, 24
          %s153 = scalar_lea.vmem [#allocation2], %s152
          %s154 = smul.u32 3, %s16
          %156 = vsyncadd %s150, 0
          %s157 = smul.addr %s154, 2
          %s158 = smul.addr %s157, 4
          %s159 = scalar_lea.hbm %s0, %s158
          %s160 = sshll.u32 %s159, 4
          %s161 = int_to_ptr.hbm [resolvable:$true] %s160
          %s162 = sshll.u32 %s153, 4
          %s163 = int_to_ptr.vmem [resolvable:$true] %s162
          %168 = dma.hbm_to_vmem [thread:$0]  %s161, 384, %s163, %s150, 128, 128, 8
        $region28: #{tpu_custom_call.1} parent=23 // pred_fallthru
          _
      $region24: #{tpu_custom_call.1} parent=5 // pred_fallthru
        _
      %p169 = scmp.le.s32.totalorder 1, %s16
      %p170 = scmp.lt.s32.totalorder %s16, 3
      %p171 = pnand %p169, %p170
      %p172 = pneg %p171
      // Predicated region
      $region29: #{tpu_custom_call.1} parent=5 // pred_check
        _
      $region30: #{tpu_custom_call.1} parent=5 // pred_check_branch
        %174 = sbr.rel (%p171) target = $region32
      $region31: #{tpu_custom_call.1} parent=5 // pred_region
        %s175 = ssub.s32 %s16, 1
        %s176 = sand.u32 %s29, 1
        %s177 = scalar_lea.sflag [#allocation3], %s176
        %s178 = sand.u32 %s29, 1
        %s179 = smul.addr %s178, 24
        %s180 = scalar_lea.vmem [#allocation2], %s179
        // Predicated region
        $region33: #{tpu_custom_call.1} parent=31 // pred_check
          %p181 = pneg %p42
        $region34: #{tpu_custom_call.1} parent=31 // pred_check_branch
          %183 = sbr.rel (%p181) target = $region36
        $region35: #{tpu_custom_call.1} parent=31 // pred_region
          %185 = dma.done %s177, 384
        $region36: #{tpu_custom_call.1} parent=31 // pred_fallthru
          _
        // Predicated region
        $region37: #{tpu_custom_call.1} parent=31 // pred_check
          %p186 = pneg %p63
        $region38: #{tpu_custom_call.1} parent=31 // pred_check_branch
          %188 = sbr.rel (%p186) target = $region40
        $region39: #{tpu_custom_call.1} parent=31 // pred_region
          %190 = dma.done [#allocation6], 1280
        $region40: #{tpu_custom_call.1} parent=31 // pred_fallthru
          _
        %s191 = sand.u32 %s29, 1
        %s192 = scalar_lea.sflag [#allocation3], %s191
        %s193 = sand.u32 %s29, 1
        %s194 = smul.addr %s193, 24
        %s195 = scalar_lea.vmem [#allocation2], %s194
        %p196 = pneg %p42
        %p197 = pneg %p39
        %p198 = pneg %p63
        %p199 = pneg %p60
        %p200 = pneg %p84
        %p201 = pneg %p81
        %p202 = pneg %p110
        %p203 = pneg %p107
        %s204 = sand.u32 %s97, 1
        %s205 = scalar_lea.sflag [#allocation4], %s204
        %s206 = sand.u32 %s97, 1
        %s207 = smul.addr %s206, 12
        %s208 = scalar_lea.vmem [#allocation7], %s207
        %s209 = smul.u32 3, %s21
        %s210 = smul.u32 3, %s21
        %v212 = vld [vmem:[%s180] sm:$0xff]
        %v213 = vld [vmem:[%s180 + $0x8] sm:$0xff]
        %v214 = vld [vmem:[%s180 + $0x10] sm:$0xff]
        %v215 = vld [vmem:[#allocation5] sm:$0xf]
        %v216 = vld [vmem:[#allocation5 + $0x4] sm:$0xf]
        %v217 = vld [vmem:[#allocation5 + $0x8] sm:$0xf]
        %v218 = vld [vmem:[#allocation5 + $0xc] sm:$0xf]
        %v219 = vld [vmem:[#allocation5 + $0x10] sm:$0xf]
        %v220 = vld [vmem:[#allocation5 + $0x14] sm:$0xf]
        %v221 = vld [vmem:[#allocation5 + $0x18] sm:$0xf]
        %v222 = vld [vmem:[#allocation5 + $0x1c] sm:$0xf]
        %v223 = vld [vmem:[#allocation5 + $0x20] sm:$0xf]
        %v224 = vld [vmem:[#allocation5 + $0x24] sm:$0xf]
        %v225 = vld [vmem:[#allocation5 + $0x28] sm:$0xf]
        %v226 = vld [vmem:[#allocation5 + $0x2c] sm:$0xf]
        %v227 = vld [vmem:[#allocation5 + $0x30] sm:$0xf]
        %v228 = vld [vmem:[#allocation5 + $0x34] sm:$0xf]
        %v229 = vld [vmem:[#allocation5 + $0x38] sm:$0xf]
        %v230 = vld [vmem:[#allocation5 + $0x3c] sm:$0xf]
        %v231 = vld [vmem:[#allocation5 + $0x40] sm:$0xf]
        %v232 = vld [vmem:[#allocation5 + $0x44] sm:$0xf]
        %v233 = vld [vmem:[#allocation5 + $0x48] sm:$0xf]
        %v234 = vld [vmem:[#allocation5 + $0x4c] sm:$0xf]
        %v235 = vld [vmem:[%s2] sm:$0x1]
        %v237 = vperm.slane %v235, 0
        %v242 = vunpack.c.l.b16 %v212
        %v243 = vunpack.c.h.b16 %v212
        %v244 = vunpack.c.l.b16 %v213
        %v245 = vunpack.c.h.b16 %v213
        %v246 = vunpack.c.l.b16 %v214
        %v247 = vunpack.c.h.b16 %v214
        %v248 = vpack.c.b16 %v244, %v242
        %v249 = vpack.c.b16 %v245, %v243
        %v250 = vpack.c.b16 %v246, %v246
        %v251 = vpack.c.b16 %v247, %v247
        %v274 = vunpack.c.l.b16 %v215
        %v275 = vunpack.c.l.b16 %v216
        %v276 = vunpack.c.l.b16 %v217
        %v277 = vunpack.c.l.b16 %v218
        %v278 = vunpack.c.l.b16 %v219
        %v279 = vunpack.c.l.b16 %v220
        %v280 = vunpack.c.l.b16 %v221
        %v281 = vunpack.c.l.b16 %v222
        %v282 = vunpack.c.l.b16 %v223
        %v283 = vunpack.c.l.b16 %v224
        %v284 = vunpack.c.l.b16 %v225
        %v285 = vunpack.c.l.b16 %v226
        %v286 = vunpack.c.l.b16 %v227
        %v287 = vunpack.c.l.b16 %v228
        %v288 = vunpack.c.l.b16 %v229
        %v289 = vunpack.c.l.b16 %v230
        %v290 = vunpack.c.l.b16 %v231
        %v291 = vunpack.c.l.b16 %v232
        %v292 = vunpack.c.l.b16 %v233
        %v293 = vunpack.c.l.b16 %v234
        %v294 = vpack.c.b16 %v275, %v274
        %v295 = vpack.c.b16 %v277, %v276
        %v296 = vpack.c.b16 %v279, %v278
        %v297 = vpack.c.b16 %v281, %v280
        %v298 = vpack.c.b16 %v283, %v282
        %v299 = vpack.c.b16 %v285, %v284
        %v300 = vpack.c.b16 %v287, %v286
        %v301 = vpack.c.b16 %v289, %v288
        %v302 = vpack.c.b16 %v291, %v290
        %v303 = vpack.c.b16 %v293, %v292
        %vm314 = vcmask 261120
        %v316 = vsel %vm314, %v249, 0
        %v319 = vsel %vm314, %v251, 0
        %321 = vmatpush.bf16.msra.mxu0 %v301
        %322 = vmatpush.bf16.msra.mxu0 %v300
        %323 = vmatpush.bf16.msra.mxu0 %v299
        %324 = vmatpush.bf16.msra.mxu0 %v298
        %325 = vmatpush.bf16.msra.mxu0 %v297
        %326 = vmatpush.bf16.msra.mxu0 %v296
        %327 = vmatpush.bf16.msra.mxu0 %v295
        %328 = vmatpush.bf16.msra.mxu0 %v294
        %329 = vmatmul.bf16.gmra.mxu0 %v248
        %v330 = vpop.f32.mrf.mxu0
        %v331 = vadd.f32 %v237, %v330
        %v332 = vpop.f32.mrf.mxu0
        %v333 = vadd.f32 %v237, %v332
        %334 = vmatmul.bf16.gmra.mxu0 %v250
        %v335 = vpop.f32.mrf.mxu0
        %v336 = vadd.f32 %v237, %v335
        %v337 = vpop.f32.mrf.mxu0
        %338 = vdwg.mxu0
        %339 = vmatpush.bf16.msra.mxu0 0
        %340 = vmatpush.bf16.msra.mxu0 0
        %341 = vmatpush.bf16.msra.mxu0 0
        %342 = vmatpush.bf16.msra.mxu0 0
        %343 = vmatpush.bf16.msra.mxu0 0
        %344 = vmatpush.bf16.msra.mxu0 0
        %345 = vmatpush.bf16.msra.mxu0 %v303
        %346 = vmatpush.bf16.msra.mxu0 %v302
        %347 = vmatmul.bf16.gmra.mxu0 %v316
        %v348 = vpop.f32.mrf.mxu0
        %v349 = vadd.f32 %v331, %v348
        %v350 = vpop.f32.mrf.mxu0
        %v351 = vadd.f32 %v333, %v350
        %352 = vmatmul.bf16.gmra.mxu0 %v319
        %v353 = vpop.f32.mrf.mxu0
        %v354 = vadd.f32 %v336, %v353
        %v355 = vpop.f32.mrf.mxu0
        %356 = vdwg.mxu0
        %357 = vmax.xlane.f32.xlu0 %v349
        %v358 = vpop.xlane.xlu0 %357
        %359 = vmax.xlane.f32.xlu0 %v351
        %v360 = vpop.xlane.xlu0 %359
        %361 = vmax.xlane.f32.xlu0 %v354
        %v362 = vpop.xlane.xlu0 %361
        %v363 = vsub.f32 %v349, %v358
        %v364 = vsub.f32 %v351, %v360
        %v365 = vsub.f32 %v354, %v362
        %v366 = vmul.f32 %v363, 1.442695
        %v367 = vpow.pop %v366
        %v368 = vmul.f32 %v364, 1.442695
        %v369 = vpow.pop %v368
        %v370 = vmul.f32 %v365, 1.442695
        %v371 = vpow.pop %v370
        %372 = vadd.xlane.f32.xlu0 %v367
        %v373 = vpop.xlane.xlu0 %372
        %374 = vadd.xlane.f32.xlu0 %v369
        %v375 = vpop.xlane.xlu0 %374
        %376 = vadd.xlane.f32.xlu0 %v371
        %v377 = vpop.xlane.xlu0 %376
        %v378 = vrcp.pop %v373
        %v379 = vrcp.pop %v375
        %v380 = vrcp.pop %v377
        %v381 = vmul.f32 %v367, %v378
        %v382 = vmul.f32 %v369, %v379
        %v383 = vmul.f32 %v371, %v380
        %v384 = vpack.c.bf16 %v381, %v381
        %v385 = vpack.c.bf16 %v382, %v382
        %v386 = vpack.c.bf16 %v383, %v383
        %387 = vst [vmem:[%s208] sm:$0xf] %v384
        %388 = vst [vmem:[%s208 + $0x4] sm:$0xf] %v385
        %389 = vst [vmem:[%s208 + $0x8] sm:$0xf] %v386
        %s390 = sand.u32 %s97, 1
        %s391 = scalar_lea.sflag [#allocation4], %s390
        %s392 = sand.u32 %s97, 1
        %s393 = smul.addr %s392, 12
        %s394 = scalar_lea.vmem [#allocation7], %s393
        // Predicated region
        $region41: #{tpu_custom_call.1} parent=31 // pred_check
          %p395 = pneg %p107
        $region42: #{tpu_custom_call.1} parent=31 // pred_check_branch
          %397 = sbr.rel (%p395) target = $region44
        $region43: #{tpu_custom_call.1} parent=31 // pred_region
          %s398 = smul.u32 3, %s21
          %400 = vsyncadd %s391, 0
          %s401 = smul.addr %s398, 4
          %s402 = scalar_lea.hbm %s3, %s401
          %s403 = sshll.u32 %s394, 4
          %s404 = int_to_ptr.vmem [resolvable:$true] %s403
          %s405 = sshll.u32 %s402, 4
          %s406 = int_to_ptr.hbm [resolvable:$true] %s405
          %411 = dma.vmem_to_hbm [thread:$0]  %s404, 192, %s406, %s391, 64, 64, 4
        $region44: #{tpu_custom_call.1} parent=31 // pred_fallthru
          _
      $region32: #{tpu_custom_call.1} parent=5 // pred_fallthru
        _
      %p412 = scmp.le.s32.totalorder 2, %s16
      // Predicated region
      $region45: #{tpu_custom_call.1} parent=5 // pred_check
        %p413 = pneg %p412
      $region46: #{tpu_custom_call.1} parent=5 // pred_check_branch
        %415 = sbr.rel (%p413) target = $region48
      $region47: #{tpu_custom_call.1} parent=5 // pred_region
        %s416 = ssub.s32 %s16, 2
        // Predicated region
        $region49: #{tpu_custom_call.1} parent=47 // pred_check
          %p417 = pneg %p113
        $region50: #{tpu_custom_call.1} parent=47 // pred_check_branch
          %419 = sbr.rel (%p417) target = $region52
        $region51: #{tpu_custom_call.1} parent=47 // pred_region
          %s420 = sand.u32 %s98, 1
          %s421 = scalar_lea.sflag [#allocation4], %s420
          %s422 = sand.u32 %s98, 1
          %s423 = smul.addr %s422, 12
          %s424 = scalar_lea.vmem [#allocation7], %s423
          %426 = dma.done %s421, 192
        $region52: #{tpu_custom_call.1} parent=47 // pred_fallthru
          _
      $region48: #{tpu_custom_call.1} parent=5 // pred_fallthru
        _
    $region6: #{tpu_custom_call.1} parent=1 // loop_footer
      %s20 = sadd.s32 1, %s16
    $region7: #{tpu_custom_call.1} parent=1 // loop_footer_branch
      %15 = sbr.rel target = $region3
    $region8: #{tpu_custom_call.1} parent=1 // loop_exit
      _
    %427 = vsyncpa [#allocation3], 1
    %s428 = scalar_lea.sflag [#allocation3], 1
    %429 = vsyncpa %s428, 1
    %430 = vsyncpa [#allocation6], 1
    %431 = vsyncpa [#allocation4], 1
    %s432 = scalar_lea.sflag [#allocation4], 1
    %433 = vsyncpa %s432, 1

</llo_original>
